<compile_context>
chip_gen: v6e
topology: v6e:2x2x1
jax: 0.10.0
libtpu: 0.0.40
codegen_flags: <defaults>
</compile_context>

<pallas_src>
import jax
import jax.numpy as jnp
from jax import lax
from jax.experimental import pallas as pl
from jax.experimental.pallas import tpu as pltpu


def _write_im2col(col_ref, a, col_off, L):
    """Write the stacked 3-tap matrix of `a` (C, L) into col_ref[:, col_off:col_off+L].

    Tap k occupies rows [k*C, (k+1)*C) so that
    col[k*C + c, col_off + l] == a_padded[c, l + k]   (pad=1 semantics).
    `col_off` and `L` are Python ints -> static slices.
    """
    C = a.shape[0]
    zc = jnp.zeros((C, 1), a.dtype)
    col_ref[0:C,       col_off:col_off + L] = jnp.concatenate([zc, a[:, : L - 1]], axis=1)
    col_ref[C:2 * C,   col_off:col_off + L] = a
    col_ref[2 * C:3 * C, col_off:col_off + L] = jnp.concatenate([a[:, 1:], zc], axis=1)


def convblock_kernel(x_ref, w1_ref, w2_ref, o_ref, xcol_ref, hcol_ref):
    bt, Cin, L = x_ref.shape          # all static Python ints
    Cout = o_ref.shape[1]

    # ---- Conv1d(Cin -> Cout, k=3, pad=1, bias=False) + ReLU : one MXU matmul ----
    for b in range(bt):               # static unroll; packs batch rows along lanes
        _write_im2col(xcol_ref, x_ref[b].astype(jnp.float32), b * L, L)
    h = jnp.dot(w1_ref[...], xcol_ref[...], preferred_element_type=jnp.float32)
    h = jnp.maximum(h, 0.0)           # (Cout, bt*L)

    # ---- Conv1d(Cout -> Cout, k=3, pad=1, bias=False) + ReLU : one MXU matmul ----
    for b in range(bt):
        _write_im2col(hcol_ref, h[:, b * L:(b + 1) * L], b * L, L)
    y = jnp.dot(w2_ref[...], hcol_ref[...], preferred_element_type=jnp.float32)
    y = jnp.maximum(y, 0.0)           # (Cout, bt*L)

    for b in range(bt):               # un-pack the lane-stacked result per batch row
        o_ref[b] = y[:, b * L:(b + 1) * L].astype(o_ref.dtype)


def convblock_forward(x, w1, w2, *, lane_target=128):
    """x: (B, Cin, L); w1: (Cout, Cin, 3); w2: (Cout, Cout, 3) -> (B, Cout, L)."""
    B, Cin, L = x.shape
    Cout = w1.shape[0]

    # How many batch rows to pack per grid step: fill ~lane_target lanes, must divide B.
    bt = max(1, min(B, lane_target // max(L, 1)))
    while B % bt != 0:
        bt -= 1

    # Fold the 3 kernel taps into the contraction dimension:
    # w1m[o, k*Cin + c] = w1[o, c, k]  (matches the im2col row stacking).
    w1m = jnp.transpose(w1, (0, 2, 1)).reshape(Cout, 3 * Cin)
    w2m = jnp.transpose(w2, (0, 2, 1)).reshape(Cout, 3 * Cout)

    return pl.pallas_call(
        convblock_kernel,
        out_shape=jax.ShapeDtypeStruct((B, Cout, L), x.dtype),
        grid_spec=pltpu.PrefetchScalarGridSpec(
            num_scalar_prefetch=0,
            grid=(B // bt,),
            in_specs=[
                pl.BlockSpec((bt, Cin, L), lambda g: (g, 0, 0)),
                pl.BlockSpec((Cout, 3 * Cin), lambda g: (0, 0)),   # resident weights
                pl.BlockSpec((Cout, 3 * Cout), lambda g: (0, 0)),  # resident weights
            ],
            out_specs=pl.BlockSpec((bt, Cout, L), lambda g: (g, 0, 0)),
            scratch_shapes=[
                pltpu.VMEM((3 * Cin, bt * L), jnp.float32),    # im2col of the input
                pltpu.VMEM((3 * Cout, bt * L), jnp.float32),   # im2col of the hidden act
            ],
        ),
        compiler_params=pltpu.CompilerParams(dimension_semantics=("parallel",)),
    )(x, w1m, w2m)


def reference(x, w1, w2):
    """Pure-JAX reference using lax convolutions (independent implementation)."""
    dn = ("NCH", "OIH", "NCH")
    h = lax.conv_general_dilated(x, w1, (1,), [(1, 1)], dimension_numbers=dn)
    h = jnp.maximum(h, 0.0)
    h = lax.conv_general_dilated(h, w2, (1,), [(1, 1)], dimension_numbers=dn)
    return jnp.maximum(h, 0.0)


if __name__ == "__main__":
    B, Cin, Cout, L = 2, 4, 8, 16

    key = jax.random.PRNGKey(0)
    kx, k1, k2 = jax.random.split(key, 3)
    x = jax.random.normal(kx, (B, Cin, L), dtype=jnp.float32)
    w1 = jax.random.normal(k1, (Cout, Cin, 3), dtype=jnp.float32) * 0.2    # Conv1d weight
    w2 = jax.random.normal(k2, (Cout, Cout, 3), dtype=jnp.float32) * 0.2   # Conv1d weight

    y = jax.block_until_ready(convblock_forward(x, w1, w2))
    y_ref = jax.block_until_ready(reference(x, w1, w2))

    assert y.shape == (B, Cout, L), y.shape
    assert jnp.allclose(y, y_ref, atol=1e-5, rtol=1e-5), float(jnp.max(jnp.abs(y - y_ref)))

    print("KERNEL_OK")
</pallas_src>

<mosaic_0001>
module attributes {stable_mosaic.version = 11 : i64} {
  func.func @convblock_kernel(%arg0: i32, %arg1: memref<2x4x16xf32, #tpu.memory_space<vmem>>, %arg2: memref<8x12xf32, #tpu.memory_space<vmem>>, %arg3: memref<8x24xf32, #tpu.memory_space<vmem>>, %arg4: memref<2x8x16xf32, #tpu.memory_space<vmem>>, %arg5: memref<12x32xf32, #tpu.memory_space<vmem>>, %arg6: memref<24x32xf32, #tpu.memory_space<vmem>>) attributes {dimension_semantics = [#tpu.dimension_semantics<parallel>], iteration_bounds = array<i64: 1>, scalar_prefetch = 0 : i64, scratch_operands = 2 : i64, tpu.core_type = #tpu.core_type<tc>, window_params = [{transform_indices = @transform_0, window_bounds = array<i64: 2, 4, 16>}, {pipeline_mode = #tpu.pipeline_mode<synchronous>, transform_indices = @transform_1, window_bounds = array<i64: 8, 12>}, {pipeline_mode = #tpu.pipeline_mode<synchronous>, transform_indices = @transform_2, window_bounds = array<i64: 8, 24>}, {transform_indices = @transform_3, window_bounds = array<i64: 2, 8, 16>}]} {
    %c0 = arith.constant 0 : index
    %c0_0 = arith.constant 0 : index
    %c0_1 = arith.constant 0 : index
    %0 = vector.load %arg1[%c0, %c0_0, %c0_1] : memref<2x4x16xf32, #tpu.memory_space<vmem>>, vector<1x4x16xf32>
    %1 = vector.shape_cast %0 : vector<1x4x16xf32> to vector<4x16xf32>
    %cst = arith.constant 0.000000e+00 : f32
    %2 = vector.broadcast %cst : f32 to vector<4x1xf32>
    %3 = vector.extract_strided_slice %1 {offsets = [0, 0], sizes = [4, 15], strides = [1, 1]} : vector<4x16xf32> to vector<4x15xf32>
    %4 = tpu.concatenate %2, %3 in 1 : vector<4x1xf32>, vector<4x15xf32> -> vector<4x16xf32>
    %c0_2 = arith.constant 0 : index
    %c0_3 = arith.constant 0 : index
    %5 = vector.load %arg5[%c0_2, %c0_3] : memref<12x32xf32, #tpu.memory_space<vmem>>, vector<4x16xf32>
    tpu.vector_store %arg5[%c0_2, %c0_3], %4 {strides = array<i32>} : memref<12x32xf32, #tpu.memory_space<vmem>>, vector<4x16xf32>,
    %c4 = arith.constant 4 : index
    %c0_4 = arith.constant 0 : index
    %6 = vector.load %arg5[%c4, %c0_4] : memref<12x32xf32, #tpu.memory_space<vmem>>, vector<4x16xf32>
    tpu.vector_store %arg5[%c4, %c0_4], %1 {strides = array<i32>} : memref<12x32xf32, #tpu.memory_space<vmem>>, vector<4x16xf32>,
    %7 = vector.extract_strided_slice %1 {offsets = [0, 1], sizes = [4, 15], strides = [1, 1]} : vector<4x16xf32> to vector<4x15xf32>
    %8 = tpu.concatenate %7, %2 in 1 : vector<4x15xf32>, vector<4x1xf32> -> vector<4x16xf32>
    %c8 = arith.constant 8 : index
    %c0_5 = arith.constant 0 : index
    %9 = vector.load %arg5[%c8, %c0_5] : memref<12x32xf32, #tpu.memory_space<vmem>>, vector<4x16xf32>
    tpu.vector_store %arg5[%c8, %c0_5], %8 {strides = array<i32>} : memref<12x32xf32, #tpu.memory_space<vmem>>, vector<4x16xf32>,
    %c1 = arith.constant 1 : index
    %c0_6 = arith.constant 0 : index
    %c0_7 = arith.constant 0 : index
    %10 = vector.load %arg1[%c1, %c0_6, %c0_7] : memref<2x4x16xf32, #tpu.memory_space<vmem>>, vector<1x4x16xf32>
    %11 = vector.shape_cast %10 : vector<1x4x16xf32> to vector<4x16xf32>
    %cst_8 = arith.constant 0.000000e+00 : f32
    %12 = vector.broadcast %cst_8 : f32 to vector<4x1xf32>
    %13 = vector.extract_strided_slice %11 {offsets = [0, 0], sizes = [4, 15], strides = [1, 1]} : vector<4x16xf32> to vector<4x15xf32>
    %14 = tpu.concatenate %12, %13 in 1 : vector<4x1xf32>, vector<4x15xf32> -> vector<4x16xf32>
    %c0_9 = arith.constant 0 : index
    %c16 = arith.constant 16 : index
    %15 = vector.load %arg5[%c0_9, %c16] : memref<12x32xf32, #tpu.memory_space<vmem>>, vector<4x16xf32>
    tpu.vector_store %arg5[%c0_9, %c16], %14 {strides = array<i32>} : memref<12x32xf32, #tpu.memory_space<vmem>>, vector<4x16xf32>,
    %c4_10 = arith.constant 4 : index
    %c16_11 = arith.constant 16 : index
    %16 = vector.load %arg5[%c4_10, %c16_11] : memref<12x32xf32, #tpu.memory_space<vmem>>, vector<4x16xf32>
    tpu.vector_store %arg5[%c4_10, %c16_11], %11 {strides = array<i32>} : memref<12x32xf32, #tpu.memory_space<vmem>>, vector<4x16xf32>,
    %17 = vector.extract_strided_slice %11 {offsets = [0, 1], sizes = [4, 15], strides = [1, 1]} : vector<4x16xf32> to vector<4x15xf32>
    %18 = tpu.concatenate %17, %12 in 1 : vector<4x15xf32>, vector<4x1xf32> -> vector<4x16xf32>
    %c8_12 = arith.constant 8 : index
    %c16_13 = arith.constant 16 : index
    %19 = vector.load %arg5[%c8_12, %c16_13] : memref<12x32xf32, #tpu.memory_space<vmem>>, vector<4x16xf32>
    tpu.vector_store %arg5[%c8_12, %c16_13], %18 {strides = array<i32>} : memref<12x32xf32, #tpu.memory_space<vmem>>, vector<4x16xf32>,
    %c0_14 = arith.constant 0 : index
    %c0_15 = arith.constant 0 : index
    %20 = vector.load %arg2[%c0_14, %c0_15] : memref<8x12xf32, #tpu.memory_space<vmem>>, vector<8x12xf32>
    %c0_16 = arith.constant 0 : index
    %c0_17 = arith.constant 0 : index
    %21 = vector.load %arg5[%c0_16, %c0_17] : memref<12x32xf32, #tpu.memory_space<vmem>>, vector<12x32xf32>
    %cst_18 = arith.constant dense<0.000000e+00> : vector<8x32xf32>
    %22 = tpu.matmul %20, %21, %cst_18 {dimension_numbers = #tpu.dot_dimension_numbers<[1], [0], [0], [1], [0, 0, 1, 1], [], []>} : vector<8x12xf32>, vector<12x32xf32>, vector<8x32xf32> -> vector<8x32xf32>
    %cst_19 = arith.constant 0.000000e+00 : f32
    %23 = vector.broadcast %cst_19 : f32 to vector<8x32xf32>
    %24 = arith.maximumf %22, %23 : vector<8x32xf32>
    %25 = vector.extract_strided_slice %24 {offsets = [0, 0], sizes = [8, 16], strides = [1, 1]} : vector<8x32xf32> to vector<8x16xf32>
    %cst_20 = arith.constant 0.000000e+00 : f32
    %26 = vector.broadcast %cst_20 : f32 to vector<8x1xf32>
    %27 = vector.extract_strided_slice %25 {offsets = [0, 0], sizes = [8, 15], strides = [1, 1]} : vector<8x16xf32> to vector<8x15xf32>
    %28 = tpu.concatenate %26, %27 in 1 : vector<8x1xf32>, vector<8x15xf32> -> vector<8x16xf32>
    %c0_21 = arith.constant 0 : index
    %c0_22 = arith.constant 0 : index
    %29 = vector.load %arg6[%c0_21, %c0_22] : memref<24x32xf32, #tpu.memory_space<vmem>>, vector<8x16xf32>
    tpu.vector_store %arg6[%c0_21, %c0_22], %28 {strides = array<i32>} : memref<24x32xf32, #tpu.memory_space<vmem>>, vector<8x16xf32>,
    %c8_23 = arith.constant 8 : index
    %c0_24 = arith.constant 0 : index
    %30 = vector.load %arg6[%c8_23, %c0_24] : memref<24x32xf32, #tpu.memory_space<vmem>>, vector<8x16xf32>
    tpu.vector_store %arg6[%c8_23, %c0_24], %25 {strides = array<i32>} : memref<24x32xf32, #tpu.memory_space<vmem>>, vector<8x16xf32>,
    %31 = vector.extract_strided_slice %25 {offsets = [0, 1], sizes = [8, 15], strides = [1, 1]} : vector<8x16xf32> to vector<8x15xf32>
    %32 = tpu.concatenate %31, %26 in 1 : vector<8x15xf32>, vector<8x1xf32> -> vector<8x16xf32>
    %c16_25 = arith.constant 16 : index
    %c0_26 = arith.constant 0 : index
    %33 = vector.load %arg6[%c16_25, %c0_26] : memref<24x32xf32, #tpu.memory_space<vmem>>, vector<8x16xf32>
    tpu.vector_store %arg6[%c16_25, %c0_26], %32 {strides = array<i32>} : memref<24x32xf32, #tpu.memory_space<vmem>>, vector<8x16xf32>,
    %34 = vector.extract_strided_slice %24 {offsets = [0, 16], sizes = [8, 16], strides = [1, 1]} : vector<8x32xf32> to vector<8x16xf32>
    %cst_27 = arith.constant 0.000000e+00 : f32
    %35 = vector.broadcast %cst_27 : f32 to vector<8x1xf32>
    %36 = vector.extract_strided_slice %34 {offsets = [0, 0], sizes = [8, 15], strides = [1, 1]} : vector<8x16xf32> to vector<8x15xf32>
    %37 = tpu.concatenate %35, %36 in 1 : vector<8x1xf32>, vector<8x15xf32> -> vector<8x16xf32>
    %c0_28 = arith.constant 0 : index
    %c16_29 = arith.constant 16 : index
    %38 = vector.load %arg6[%c0_28, %c16_29] : memref<24x32xf32, #tpu.memory_space<vmem>>, vector<8x16xf32>
    tpu.vector_store %arg6[%c0_28, %c16_29], %37 {strides = array<i32>} : memref<24x32xf32, #tpu.memory_space<vmem>>, vector<8x16xf32>,
    %c8_30 = arith.constant 8 : index
    %c16_31 = arith.constant 16 : index
    %39 = vector.load %arg6[%c8_30, %c16_31] : memref<24x32xf32, #tpu.memory_space<vmem>>, vector<8x16xf32>
    tpu.vector_store %arg6[%c8_30, %c16_31], %34 {strides = array<i32>} : memref<24x32xf32, #tpu.memory_space<vmem>>, vector<8x16xf32>,
    %40 = vector.extract_strided_slice %34 {offsets = [0, 1], sizes = [8, 15], strides = [1, 1]} : vector<8x16xf32> to vector<8x15xf32>
    %41 = tpu.concatenate %40, %35 in 1 : vector<8x15xf32>, vector<8x1xf32> -> vector<8x16xf32>
    %c16_32 = arith.constant 16 : index
    %c16_33 = arith.constant 16 : index
    %42 = vector.load %arg6[%c16_32, %c16_33] : memref<24x32xf32, #tpu.memory_space<vmem>>, vector<8x16xf32>
    tpu.vector_store %arg6[%c16_32, %c16_33], %41 {strides = array<i32>} : memref<24x32xf32, #tpu.memory_space<vmem>>, vector<8x16xf32>,
    %c0_34 = arith.constant 0 : index
    %c0_35 = arith.constant 0 : index
    %43 = vector.load %arg3[%c0_34, %c0_35] : memref<8x24xf32, #tpu.memory_space<vmem>>, vector<8x24xf32>
    %c0_36 = arith.constant 0 : index
    %c0_37 = arith.constant 0 : index
    %44 = vector.load %arg6[%c0_36, %c0_37] : memref<24x32xf32, #tpu.memory_space<vmem>>, vector<24x32xf32>
    %cst_38 = arith.constant dense<0.000000e+00> : vector<8x32xf32>
    %45 = tpu.matmul %43, %44, %cst_38 {dimension_numbers = #tpu.dot_dimension_numbers<[1], [0], [0], [1], [0, 0, 1, 1], [], []>} : vector<8x24xf32>, vector<24x32xf32>, vector<8x32xf32> -> vector<8x32xf32>
    %cst_39 = arith.constant 0.000000e+00 : f32
    %46 = vector.broadcast %cst_39 : f32 to vector<8x32xf32>
    %47 = arith.maximumf %45, %46 : vector<8x32xf32>
    %48 = vector.extract_strided_slice %47 {offsets = [0, 0], sizes = [8, 16], strides = [1, 1]} : vector<8x32xf32> to vector<8x16xf32>
    %c0_40 = arith.constant 0 : index
    %c0_41 = arith.constant 0 : index
    %c0_42 = arith.constant 0 : index
    %49 = vector.load %arg4[%c0_40, %c0_41, %c0_42] : memref<2x8x16xf32, #tpu.memory_space<vmem>>, vector<1x8x16xf32>
    %50 = vector.shape_cast %49 : vector<1x8x16xf32> to vector<8x16xf32>
    %51 = vector.shape_cast %48 : vector<8x16xf32> to vector<1x8x16xf32>
    tpu.vector_store %arg4[%c0_40, %c0_41, %c0_42], %51 {strides = array<i32>} : memref<2x8x16xf32, #tpu.memory_space<vmem>>, vector<1x8x16xf32>,
    %52 = vector.extract_strided_slice %47 {offsets = [0, 16], sizes = [8, 16], strides = [1, 1]} : vector<8x32xf32> to vector<8x16xf32>
    %c1_43 = arith.constant 1 : index
    %c0_44 = arith.constant 0 : index
    %c0_45 = arith.constant 0 : index
    %53 = vector.load %arg4[%c1_43, %c0_44, %c0_45] : memref<2x8x16xf32, #tpu.memory_space<vmem>>, vector<1x8x16xf32>
    %54 = vector.shape_cast %53 : vector<1x8x16xf32> to vector<8x16xf32>
    %55 = vector.shape_cast %52 : vector<8x16xf32> to vector<1x8x16xf32>
    tpu.vector_store %arg4[%c1_43, %c0_44, %c0_45], %55 {strides = array<i32>} : memref<2x8x16xf32, #tpu.memory_space<vmem>>, vector<1x8x16xf32>,
    return
  }
  func.func @transform_0(%arg0: i32) -> (i32, i32, i32) {
    %c0_i32 = arith.constant 0 : i32
    %c0_i32_0 = arith.constant 0 : i32
    %c0_i32_1 = arith.constant 0 : i32
    return %arg0, %c0_i32, %c0_i32_0 : i32, i32, i32
  }
  func.func @transform_1(%arg0: i32) -> (i32, i32) {
    %c0_i32 = arith.constant 0 : i32
    %c0_i32_0 = arith.constant 0 : i32
    %c0_i32_1 = arith.constant 0 : i32
    return %c0_i32, %c0_i32_0 : i32, i32
  }
  func.func @transform_2(%arg0: i32) -> (i32, i32) {
    %c0_i32 = arith.constant 0 : i32
    %c0_i32_0 = arith.constant 0 : i32
    %c0_i32_1 = arith.constant 0 : i32
    return %c0_i32, %c0_i32_0 : i32, i32
  }
  func.func @transform_3(%arg0: i32) -> (i32, i32, i32) {
    %c0_i32 = arith.constant 0 : i32
    %c0_i32_0 = arith.constant 0 : i32
    %c0_i32_1 = arith.constant 0 : i32
    return %arg0, %c0_i32, %c0_i32_0 : i32, i32, i32
  }
}

</mosaic_0001>

<llo_original>
// kernel: tpu_custom_call.1
$region0: #{tpu_custom_call.1}
  #allocation0 [shape = 'u32[]', space=smem, size = 0x4, offset = 0x4, fixed_abs, tag = 'smem constant byte address 0x4 - core index']
  #allocation1 [shape = 'u32[144,128]{1,0:T(1,128)}', space=vmem, size = 0x12000, scoped, tag = 'internal scratch']
  #allocation2 [shape = 'f32[12,32]{1,0:T(8,128)}', space=vmem, size = 0x2000, scoped, tag = 'scratch operand']
  #allocation3 [shape = 'f32[24,32]{1,0:T(8,128)}', space=vmem, size = 0x3000, scoped, tag = 'scratch operand']
  %s0 = inlined_call_operand.hbm [shape: f32[2,4,16], index: 0, kind: input, shape index: {}]
  %s1 = inlined_call_operand.hbm [shape: f32[8,12], index: 1, kind: input, shape index: {}]
  %s2 = inlined_call_operand.hbm [shape: f32[8,24], index: 2, kind: input, shape index: {}]
  %s3 = inlined_call_operand.hbm [shape: f32[2,8,16], index: 3, kind: output, shape index: {}]
  %s4 = sld [smem:[#allocation0]]
  $region34: #{tpu_custom_call.1} parent=0
    _
  %s6 = ssub.s32 1, %s4
  %s7 = scalar_select 0, %s6, %s4
  $region1: #{tpu_custom_call.1} parent=0
    #allocation4 [shape = 'u8[4096]{0}', space=vmem, size = 0x1000, scoped, tag = 'input window, operand 0, single buffered']
    #allocation5 [shape = 's32[1]{0}', space=sflag, size = 0x4, scoped, tag = 'scoped memory for tpu_custom_call.1']
    #allocation6 [shape = 's32[1]{0}', space=sflag, size = 0x4, scoped, tag = 'scoped memory for tpu_custom_call.1']
    #allocation7 [shape = 'u8[4096]{0}', space=vmem, size = 0x1000, scoped, tag = 'input window, operand 1, single buffered']
    #allocation8 [shape = 's32[1]{0}', space=sflag, size = 0x4, scoped, tag = 'scoped memory for tpu_custom_call.1']
    #allocation9 [shape = 'u8[4096]{0}', space=vmem, size = 0x1000, scoped, tag = 'input window, operand 2, single buffered']
    #allocation10 [shape = 'u8[8192]{0}', space=vmem, size = 0x2000, scoped, tag = 'output window, operand 0, single buffered']
    %8 = vsyncpa [#allocation5], 0
    %9 = vsyncpa [#allocation8], 0
    %10 = vsyncpa [#allocation6], 0
    // Predicated region
    $region2: #{tpu_custom_call.1} parent=1 // pred_check
      _
    $region3: #{tpu_custom_call.1} parent=1 // pred_check_branch
      %12 = sbr.rel (0) target = $region5
    $region4: #{tpu_custom_call.1} parent=1 // pred_region
      %s14 = ssub.s32 128, 128
      %15 = vsyncadd [#allocation5], %s14
      %s16 = sshll.u32 [#allocation4], 4
      %s17 = int_to_ptr.vmem [resolvable:$true] %s16
      %22 = dma.hbm_to_vmem [thread:$0]  %s0, 128, %s17, [#allocation5], 64, 64, 4
    $region5: #{tpu_custom_call.1} parent=1 // pred_fallthru
      _
    // Predicated region
    $region6: #{tpu_custom_call.1} parent=1 // pred_check
      _
    $region7: #{tpu_custom_call.1} parent=1 // pred_check_branch
      %24 = sbr.rel (0) target = $region9
    $region8: #{tpu_custom_call.1} parent=1 // pred_region
      %s26 = ssub.s32 128, 128
      %27 = vsyncadd [#allocation8], %s26
      %s29 = sshll.u32 [#allocation7], 4
      %s30 = int_to_ptr.vmem [resolvable:$true] %s29
      %32 = dma.hbm_to_vmem [thread:$0]  %s1, 128, %s30, [#allocation8]
    $region9: #{tpu_custom_call.1} parent=1 // pred_fallthru
      _
    // Predicated region
    $region10: #{tpu_custom_call.1} parent=1 // pred_check
      _
    $region11: #{tpu_custom_call.1} parent=1 // pred_check_branch
      %34 = sbr.rel (0) target = $region13
    $region12: #{tpu_custom_call.1} parent=1 // pred_region
      %s36 = ssub.s32 128, 128
      %37 = vsyncadd [#allocation8], %s36
      %s39 = sshll.u32 [#allocation9], 4
      %s40 = int_to_ptr.vmem [resolvable:$true] %s39
      %42 = dma.hbm_to_vmem [thread:$0]  %s2, 128, %s40, [#allocation8]
    $region13: #{tpu_custom_call.1} parent=1 // pred_fallthru
      _
    // Predicated region
    $region14: #{tpu_custom_call.1} parent=1 // pred_check
      _
    $region15: #{tpu_custom_call.1} parent=1 // pred_check_branch
      %44 = sbr.rel (0) target = $region17
    $region16: #{tpu_custom_call.1} parent=1 // pred_region
      %45 = dma.done [#allocation5], 128
    $region17: #{tpu_custom_call.1} parent=1 // pred_fallthru
      _
    // Predicated region
    $region18: #{tpu_custom_call.1} parent=1 // pred_check
      _
    $region19: #{tpu_custom_call.1} parent=1 // pred_check_branch
      %47 = sbr.rel (0) target = $region21
    $region20: #{tpu_custom_call.1} parent=1 // pred_region
      %48 = dma.done [#allocation8], 128
    $region21: #{tpu_custom_call.1} parent=1 // pred_fallthru
      _
    // Predicated region
    $region22: #{tpu_custom_call.1} parent=1 // pred_check
      _
    $region23: #{tpu_custom_call.1} parent=1 // pred_check_branch
      %50 = sbr.rel (0) target = $region25
    $region24: #{tpu_custom_call.1} parent=1 // pred_region
      %51 = dma.done [#allocation8], 128
    $region25: #{tpu_custom_call.1} parent=1 // pred_fallthru
      _
    %v52 = vld [vmem:[#allocation4] sm:$0xf]
    %54 = vrot.lane.b32.xlu0 %v52, 1
    %v55 = vpop.permute.xlu0 %54
    %vm57 = vcmask 7168
    %v58 = vsel %vm57, 0.0, %v55
    %vm59 = vcmask 125952
    %60 = vst.msk [vmem:[#allocation2] sm:$0xf] %vm59, %v58
    %61 = vst.msk [vmem:[#allocation2 + $0x4] sm:$0xf] %vm59, %v52
    %62 = vrot.lane.b32.xlu0 %v52, 127
    %v63 = vpop.permute.xlu0 %62
    %vm65 = vcmask 121856
    %v66 = vsel %vm65, %v63, 0.0
    %67 = vst.msk [vmem:[#allocation2 + $0x8] sm:$0xf] %vm59, %v66
    %s68 = scalar_lea.vmem [#allocation4], 4
    %v69 = vld [vmem:[%s68] sm:$0xf]
    %71 = vrot.lane.b32.xlu0 %v69, 1
    %v72 = vpop.permute.xlu0 %71
    %v74 = vsel %vm57, 0.0, %v72
    %76 = vrot.lane.b32.xlu0 %v74, 16
    %v77 = vpop.permute.xlu0 %76
    %vm79 = vcmask 257152
    %80 = vst.msk [vmem:[#allocation2] sm:$0xf] %vm79, %v77
    %81 = vrot.lane.b32.xlu0 %v69, 16
    %v82 = vpop.permute.xlu0 %81
    %84 = vst.msk [vmem:[#allocation2 + $0x4] sm:$0xf] %vm79, %v82
    %85 = vrot.lane.b32.xlu0 %v69, 127
    %v86 = vpop.permute.xlu0 %85
    %v88 = vsel %vm65, %v86, 0.0
    %90 = vrot.lane.b32.xlu0 %v88, 16
    %v91 = vpop.permute.xlu0 %90
    %93 = vst.msk [vmem:[#allocation2 + $0x8] sm:$0xf] %vm79, %v91
    %v94 = vld [vmem:[#allocation7] sm:$0xff]
    %v95 = vld [vmem:[#allocation2] sm:$0xff]
    %v96 = vld [vmem:[#allocation2 + $0x8] sm:$0xf]
    %vm97 = vcmask 97280
    %v99 = vsel %vm97, %v94, 0
    %vm101 = vcmask 1043456
    %v103 = vsel %vm101, %v96, 0
    %105 = vmatprep.subr.mxu0 0.0
    %106 = vmatpush1.msra.mxu0 0.0
    %107 = vmatprep.subr.mxu0 0.0
    %108 = vmatpush1.msra.mxu0 0.0
    %109 = vmatprep.subr.mxu0 0.0
    %110 = vmatpush1.msra.mxu0 0.0
    %111 = vmatprep.subr.mxu0 0.0
    %112 = vmatpush1.msra.mxu0 0.0
    %113 = vmatprep.subr.mxu0 0.0
    %114 = vmatpush1.msra.mxu0 0.0
    %115 = vmatprep.subr.mxu0 0.0
    %116 = vmatpush1.msra.mxu0 0.0
    %117 = vmatprep.subr.mxu0 0.0
    %118 = vmatpush1.msra.mxu0 0.0
    %119 = vmatprep.subr.mxu0 0.0
    %120 = vmatpush1.msra.mxu0 0.0
    %121 = vmatprep.subr.mxu0 0.0
    %122 = vmatpush1.msra.mxu0 0.0
    %123 = vmatprep.subr.mxu0 0.0
    %124 = vmatpush1.msra.mxu0 0.0
    %125 = vmatprep.subr.mxu0 0.0
    %126 = vmatpush1.msra.mxu0 0.0
    %127 = vmatprep.subr.mxu0 0.0
    %128 = vmatpush1.msra.mxu0 0.0
    %129 = vmatprep.subr.mxu0 0.0
    %130 = vmatpush1.msra.mxu0 0.0
    %131 = vmatprep.subr.mxu0 0.0
    %132 = vmatpush1.msra.mxu0 0.0
    %133 = vmatprep.subr.mxu0 0.0
    %134 = vmatpush1.msra.mxu0 %v103
    %135 = vmatprep.subr.mxu0 0.0
    %136 = vmatpush1.msra.mxu0 %v95
    %137 = vmatprep.subr.mxu0 0.0
    %138 = vmatpush2.msra.mxu0 0.0
    %139 = vmatprep.subr.mxu0 0.0
    %140 = vmatpush2.msra.mxu0 0.0
    %141 = vmatprep.subr.mxu0 0.0
    %142 = vmatpush2.msra.mxu0 0.0
    %143 = vmatprep.subr.mxu0 0.0
    %144 = vmatpush2.msra.mxu0 0.0
    %145 = vmatprep.subr.mxu0 0.0
    %146 = vmatpush2.msra.mxu0 0.0
    %147 = vmatprep.subr.mxu0 0.0
    %148 = vmatpush2.msra.mxu0 0.0
    %149 = vmatprep.subr.mxu0 0.0
    %150 = vmatpush2.msra.mxu0 0.0
    %151 = vmatprep.subr.mxu0 0.0
    %152 = vmatpush2.msra.mxu0 0.0
    %153 = vmatprep.subr.mxu0 0.0
    %154 = vmatpush2.msra.mxu0 0.0
    %155 = vmatprep.subr.mxu0 0.0
    %156 = vmatpush2.msra.mxu0 0.0
    %157 = vmatprep.subr.mxu0 0.0
    %158 = vmatpush2.msra.mxu0 0.0
    %159 = vmatprep.subr.mxu0 0.0
    %160 = vmatpush2.msra.mxu0 0.0
    %161 = vmatprep.subr.mxu0 0.0
    %162 = vmatpush2.msra.mxu0 0.0
    %163 = vmatprep.subr.mxu0 0.0
    %164 = vmatpush2.msra.mxu0 0.0
    %165 = vmatprep.subr.mxu0 0.0
    %166 = vmatpush2.msra.mxu0 0.0
    %167 = vmatprep.subr.mxu0 0.0
    %168 = vmatpush2.msra.mxu0 0.0
    %169 = vmatprep.mubr.f32.mxu0 0.0
    %170 = vmatmul.mubr.f32.gmra.mxu0 %v99
    %v171 = vpop.f32.mrf.mxu0
    %v172 = vadd.f32 0.0, %v171
    %v173 = vpop.f32.mrf.mxu0
    %174 = vdwg.mxu0
    %v175 = vmax.f32 %v172, 0.0
    %177 = vrot.lane.b32.xlu0 %v175, 1
    %v178 = vpop.permute.xlu0 %177
    %v180 = vsel %vm57, 0.0, %v178
    %vm181 = vcmask 130048
    %182 = vst.msk [vmem:[#allocation3] sm:$0xff] %vm181, %v180
    %183 = vst.msk [vmem:[#allocation3 + $0x8] sm:$0xff] %vm181, %v175
    %184 = vrot.lane.b32.xlu0 %v175, 127
    %v185 = vpop.permute.xlu0 %184
    %v187 = vsel %vm65, %v185, 0.0
    %188 = vst.msk [vmem:[#allocation3 + $0x10] sm:$0xff] %vm181, %v187
    %189 = vrot.lane.b32.xlu0 %v175, 113
    %v190 = vpop.permute.xlu0 %189
    %v192 = vsel %vm57, 0.0, %v190
    %194 = vrot.lane.b32.xlu0 %v192, 16
    %v195 = vpop.permute.xlu0 %194
    %vm197 = vcmask 261248
    %198 = vst.msk [vmem:[#allocation3] sm:$0xff] %vm197, %v195
    %199 = vst.msk [vmem:[#allocation3 + $0x8] sm:$0xff] %vm197, %v175
    %200 = vrot.lane.b32.xlu0 %v175, 111
    %v201 = vpop.permute.xlu0 %200
    %v203 = vsel %vm65, %v201, 0.0
    %205 = vrot.lane.b32.xlu0 %v203, 16
    %v206 = vpop.permute.xlu0 %205
    %208 = vst.msk [vmem:[#allocation3 + $0x10] sm:$0xff] %vm197, %v206
    %v209 = vld [vmem:[#allocation9] sm:$0xff]
    %v210 = vld [vmem:[#allocation3] sm:$0xff]
    %v211 = vld [vmem:[#allocation3 + $0x8] sm:$0xff]
    %v212 = vld [vmem:[#allocation3 + $0x10] sm:$0xff]
    %vm213 = vcmask 195584
    %v215 = vsel %vm213, %v209, 0
    %217 = vmatprep.subr.mxu0 0.0
    %218 = vmatpush1.msra.mxu0 0.0
    %219 = vmatprep.subr.mxu0 0.0
    %220 = vmatpush1.msra.mxu0 0.0
    %221 = vmatprep.subr.mxu0 0.0
    %222 = vmatpush1.msra.mxu0 0.0
    %223 = vmatprep.subr.mxu0 0.0
    %224 = vmatpush1.msra.mxu0 0.0
    %225 = vmatprep.subr.mxu0 0.0
    %226 = vmatpush1.msra.mxu0 0.0
    %227 = vmatprep.subr.mxu0 0.0
    %228 = vmatpush1.msra.mxu0 0.0
    %229 = vmatprep.subr.mxu0 0.0
    %230 = vmatpush1.msra.mxu0 0.0
    %231 = vmatprep.subr.mxu0 0.0
    %232 = vmatpush1.msra.mxu0 0.0
    %233 = vmatprep.subr.mxu0 0.0
    %234 = vmatpush1.msra.mxu0 0.0
    %235 = vmatprep.subr.mxu0 0.0
    %236 = vmatpush1.msra.mxu0 0.0
    %237 = vmatprep.subr.mxu0 0.0
    %238 = vmatpush1.msra.mxu0 0.0
    %239 = vmatprep.subr.mxu0 0.0
    %240 = vmatpush1.msra.mxu0 0.0
    %241 = vmatprep.subr.mxu0 0.0
    %242 = vmatpush1.msra.mxu0 0.0
    %243 = vmatprep.subr.mxu0 0.0
    %244 = vmatpush1.msra.mxu0 %v212
    %245 = vmatprep.subr.mxu0 0.0
    %246 = vmatpush1.msra.mxu0 %v211
    %247 = vmatprep.subr.mxu0 0.0
    %248 = vmatpush1.msra.mxu0 %v210
    %249 = vmatprep.subr.mxu0 0.0
    %250 = vmatpush2.msra.mxu0 0.0
    %251 = vmatprep.subr.mxu0 0.0
    %252 = vmatpush2.msra.mxu0 0.0
    %253 = vmatprep.subr.mxu0 0.0
    %254 = vmatpush2.msra.mxu0 0.0
    %255 = vmatprep.subr.mxu0 0.0
    %256 = vmatpush2.msra.mxu0 0.0
    %257 = vmatprep.subr.mxu0 0.0
    %258 = vmatpush2.msra.mxu0 0.0
    %259 = vmatprep.subr.mxu0 0.0
    %260 = vmatpush2.msra.mxu0 0.0
    %261 = vmatprep.subr.mxu0 0.0
    %262 = vmatpush2.msra.mxu0 0.0
    %263 = vmatprep.subr.mxu0 0.0
    %264 = vmatpush2.msra.mxu0 0.0
    %265 = vmatprep.subr.mxu0 0.0
    %266 = vmatpush2.msra.mxu0 0.0
    %267 = vmatprep.subr.mxu0 0.0
    %268 = vmatpush2.msra.mxu0 0.0
    %269 = vmatprep.subr.mxu0 0.0
    %270 = vmatpush2.msra.mxu0 0.0
    %271 = vmatprep.subr.mxu0 0.0
    %272 = vmatpush2.msra.mxu0 0.0
    %273 = vmatprep.subr.mxu0 0.0
    %274 = vmatpush2.msra.mxu0 0.0
    %275 = vmatprep.subr.mxu0 0.0
    %276 = vmatpush2.msra.mxu0 0.0
    %277 = vmatprep.subr.mxu0 0.0
    %278 = vmatpush2.msra.mxu0 0.0
    %279 = vmatprep.subr.mxu0 0.0
    %280 = vmatpush2.msra.mxu0 0.0
    %281 = vmatprep.mubr.f32.mxu0 0.0
    %282 = vmatmul.mubr.f32.gmra.mxu0 %v215
    %v283 = vpop.f32.mrf.mxu0
    %v284 = vadd.f32 0.0, %v283
    %v285 = vpop.f32.mrf.mxu0
    %286 = vdwg.mxu0
    %v287 = vmax.f32 %v284, 0.0
    %288 = vst.msk [vmem:[#allocation10] sm:$0xff] %vm181, %v287
    %290 = vrot.lane.b32.xlu0 %v287, 112
    %v291 = vpop.permute.xlu0 %290
    %s293 = scalar_lea.vmem [#allocation10], 8
    %294 = vst.msk [vmem:[%s293] sm:$0xff] %vm181, %v291
    // Predicated region
    $region26: #{tpu_custom_call.1} parent=1 // pred_check
      _
    $region27: #{tpu_custom_call.1} parent=1 // pred_check_branch
      %296 = sbr.rel (0) target = $region29
    $region28: #{tpu_custom_call.1} parent=1 // pred_region
      %s298 = ssub.s32 256, 256
      %299 = vsyncadd [#allocation6], %s298
      %s300 = sshll.u32 [#allocation10], 4
      %s301 = int_to_ptr.vmem [resolvable:$true] %s300
      %306 = dma.vmem_to_hbm [thread:$0]  %s301, 256, %s3, [#allocation6], 128, 128, 8
    $region29: #{tpu_custom_call.1} parent=1 // pred_fallthru
      _
    // Predicated region
    $region30: #{tpu_custom_call.1} parent=1 // pred_check
      _
    $region31: #{tpu_custom_call.1} parent=1 // pred_check_branch
      %308 = sbr.rel (0) target = $region33
    $region32: #{tpu_custom_call.1} parent=1 // pred_region
      %309 = dma.done [#allocation6], 256
    $region33: #{tpu_custom_call.1} parent=1 // pred_fallthru
      _
    %310 = vsyncpa [#allocation5], 1
    %311 = vsyncpa [#allocation8], 1
    %312 = vsyncpa [#allocation6], 1

</llo_original>
